<compile_context>
chip_gen: v6e
topology: v6e:2x2x1
jax: 0.10.0
libtpu: 0.0.40
codegen_flags: <defaults>
</compile_context>

<pallas_src>
import functools

import jax
import jax.numpy as jnp
from jax.experimental import pallas as pl
from jax.experimental.pallas import tpu as pltpu


def _round_up(n, m):
    return ((n + m - 1) // m) * m


def _vmem_budget_bytes():
    """(tile-selection budget, scoped-VMEM limit) derived from physical VMEM."""
    cap = 64 * 1024 * 1024  # conservative default: v7x per-TensorCore VMEM
    try:
        info = pltpu.get_tpu_info()
        cap = int(getattr(info, "vmem_capacity_bytes", cap)) or cap
    except Exception:
        pass
    budget = int(cap * 0.55)                         # footprint target for tile selection
    limit = min(int(cap * 0.75), cap - (4 << 20))    # scoped-VMEM limit w/ headroom
    return budget, limit


def _choose_tiles(batch, dim, rank_p, x_itemsize, w_itemsize, out_itemsize, budget):
    """Pick (tm, tk). tk == dim means W is fully VMEM-resident (no K-split)."""
    align = {1: 32, 2: 16}.get(x_itemsize, 8)        # dtype-aware sublane packing

    resident_w = dim * rank_p * w_itemsize + 8 * rank_p * 4   # single-buffered W + bias
    if resident_w <= budget // 2:
        tk = dim
        per_row = 2 * dim * x_itemsize + 2 * rank_p * out_itemsize   # dbl-buf x tile + out tile
        avail = budget - resident_w
    else:
        # K reduction split: W streamed in (tk, rank_p) tiles, f32 accumulator in VMEM.
        tk_cap = max(128, ((budget // 4) // (rank_p * w_itemsize)) // 128 * 128)
        tk = 128
        cand = 128
        while cand <= min(dim, 8192) and cand <= tk_cap:
            if dim % cand == 0:
                tk = cand
            cand += 128
        per_row = 2 * tk * x_itemsize + 2 * rank_p * out_itemsize + rank_p * 4
        avail = budget - 2 * tk * rank_p * w_itemsize - 8 * rank_p * 4

    tm = avail // max(per_row, 1)
    tm = max(align, min(tm, 2048))
    tm = (tm // 128) * 128 if tm >= 128 else (tm // align) * align

    # Megacore (v7x): keep >= 2 batch tiles so both TensorCores stream x.
    if batch >= 256:
        tm = min(tm, _round_up(-(-batch // 2), 128))

    tm = min(tm, _round_up(batch, align))
    return int(max(tm, align)), int(tk)


def _lowrank_kernel(x_ref, w_ref, b_ref, o_ref, *, compute_dtype):
    # x_ref: (TM, dim), w_ref: (dim, Rp) resident, b_ref: (1, Rp) f32, o_ref: (TM, Rp)
    x = x_ref[...]
    if compute_dtype is not None:
        x = x.astype(compute_dtype)                  # in-VMEM cast: no extra HBM pass
    acc = jnp.dot(x, w_ref[...], preferred_element_type=jnp.float32)   # MXU
    o_ref[...] = (acc + b_ref[...]).astype(o_ref.dtype)                # VPU epilogue


def _lowrank_kernel_ksplit(x_ref, w_ref, b_ref, o_ref, acc_ref, *, compute_dtype):
    # Grid = (batch tiles, K tiles); K is last/"arbitrary"; acc_ref is f32 VMEM scratch.
    k = pl.program_id(1)

    @pl.when(k == 0)
    def _():
        acc_ref[...] = jnp.zeros_like(acc_ref)

    x = x_ref[...]
    if compute_dtype is not None:
        x = x.astype(compute_dtype)
    acc_ref[...] += jnp.dot(x, w_ref[...], preferred_element_type=jnp.float32)

    @pl.when(k == pl.num_programs(1) - 1)
    def _():
        o_ref[...] = (acc_ref[...] + b_ref[...]).astype(o_ref.dtype)


def lowrank_linear(x, weight, bias, *, compute_dtype=None, force_pallas=False):
    """y = x @ weight.T + bias  (matches torch.nn.Linear forward).

    compute_dtype: optional in-kernel cast of the x tile (e.g. jnp.bfloat16) for bf16 MXU
    rate; W is pre-cast once in the wrapper, accumulation stays f32, output keeps x.dtype.
    """
    B, dim = x.shape
    rank, dim_w = weight.shape
    assert dim == dim_w
    out_dtype = x.dtype

    # Small-problem bypass: fixed pallas_call overhead + rank->128 lane padding dominate;
    # XLA's fused dot is strictly faster for the nominal tiny shapes.
    if not force_pallas and B * dim <= 128 * 128:
        return (x @ weight.T + bias).astype(out_dtype)

    # One-time parameter prep (static): cast, transpose, lane-dense rank padding.
    w_c = weight.astype(compute_dtype) if compute_dtype is not None else weight
    wt = w_c.T                                        # (dim, rank)
    rank_p = _round_up(rank, 128)
    if rank_p != rank:
        wt = jnp.pad(wt, ((0, 0), (0, rank_p - rank)))
        bias_p = jnp.pad(bias, (0, rank_p - rank))
    else:
        bias_p = bias
    bias2d = bias_p.reshape(1, rank_p).astype(jnp.float32)

    x_itemsize = jnp.dtype(x.dtype).itemsize
    w_itemsize = jnp.dtype(wt.dtype).itemsize
    out_itemsize = jnp.dtype(out_dtype).itemsize
    budget, vmem_limit = _vmem_budget_bytes()
    tm, tk = _choose_tiles(B, dim, rank_p, x_itemsize, w_itemsize, out_itemsize, budget)

    cost = pl.CostEstimate(
        flops=2 * B * dim * rank_p,
        transcendentals=0,
        bytes_accessed=(B * dim * x_itemsize + dim * rank_p * w_itemsize
                        + B * rank_p * out_itemsize),
    )

    x_in = x
    dim_p = dim
    if tk != dim and dim % tk != 0:
        # TODO(synk): K-split with dim not a multiple of 128 currently re-pads x through HBM;
        # replace with in-kernel masking of the ragged K tile.
        dim_p = _round_up(dim, tk)
        x_in = jnp.pad(x, ((0, 0), (0, dim_p - dim)))
        wt = jnp.pad(wt, ((0, dim_p - dim), (0, 0)))

    if tk == dim_p:
        # W fully resident in VMEM (single-buffered); x streams through batch tiles.
        out = pl.pallas_call(
            functools.partial(_lowrank_kernel, compute_dtype=compute_dtype),
            out_shape=jax.ShapeDtypeStruct((B, rank_p), out_dtype),
            grid_spec=pltpu.PrefetchScalarGridSpec(
                num_scalar_prefetch=0,
                grid=(pl.cdiv(B, tm),),
                in_specs=[
                    pl.BlockSpec((tm, dim_p), lambda i: (i, 0)),
                    pl.BlockSpec((dim_p, rank_p), lambda i: (0, 0),
                                 pipeline_mode=pl.Buffered(1)),
                    pl.BlockSpec((1, rank_p), lambda i: (0, 0),
                                 pipeline_mode=pl.Buffered(1)),
                ],
                out_specs=pl.BlockSpec((tm, rank_p), lambda i: (i, 0)),
            ),
            compiler_params=pltpu.CompilerParams(
                dimension_semantics=("parallel",),
                vmem_limit_bytes=vmem_limit,
            ),
            cost_estimate=cost,
        )(x_in, wt, bias2d)
    else:
        # K-split: W streamed in (tk, rank_p) tiles, f32 accumulator in VMEM scratch.
        out = pl.pallas_call(
            functools.partial(_lowrank_kernel_ksplit, compute_dtype=compute_dtype),
            out_shape=jax.ShapeDtypeStruct((B, rank_p), out_dtype),
            grid_spec=pltpu.PrefetchScalarGridSpec(
                num_scalar_prefetch=0,
                grid=(pl.cdiv(B, tm), dim_p // tk),
                in_specs=[
                    pl.BlockSpec((tm, tk), lambda i, k: (i, k)),
                    pl.BlockSpec((tk, rank_p), lambda i, k: (k, 0)),
                    pl.BlockSpec((1, rank_p), lambda i, k: (0, 0),
                                 pipeline_mode=pl.Buffered(1)),
                ],
                out_specs=pl.BlockSpec((tm, rank_p), lambda i, k: (i, 0)),
                scratch_shapes=[pltpu.VMEM((tm, rank_p), jnp.float32)],
            ),
            compiler_params=pltpu.CompilerParams(
                dimension_semantics=("parallel", "arbitrary"),
                vmem_limit_bytes=vmem_limit,
            ),
            cost_estimate=cost,
        )(x_in, wt, bias2d)

    return out[:, :rank] if rank_p != rank else out


if __name__ == "__main__":
    key = jax.random.PRNGKey(0)
    kx, kw, kb, kx2 = jax.random.split(key, 4)

    # Nominal module-sized shapes: dim=32, rank=8, batch=8.
    batch, dim, rank = 8, 32, 8
    bound = 1.0 / (dim ** 0.5)
    weight = jax.random.uniform(kw, (rank, dim), jnp.float32, -bound, bound)
    bias = jax.random.uniform(kb, (rank,), jnp.float32, -bound, bound)
    x = jax.random.normal(kx, (batch, dim), jnp.float32)
    y_ref = x @ weight.T + bias

    # Default path (small-problem bypass).
    y = jax.block_until_ready(lowrank_linear(x, weight, bias))
    assert y.shape == (batch, rank)
    assert jnp.allclose(y, y_ref, atol=1e-5, rtol=1e-5)

    # Force the Pallas kernel on the nominal shape (lane-dense rank pad, tiny batch tile).
    y_pallas = jax.block_until_ready(lowrank_linear(x, weight, bias, force_pallas=True))
    assert y_pallas.shape == (batch, rank)
    assert jnp.allclose(y_pallas, y_ref, atol=1e-5, rtol=1e-5)

    # Moderate shape with a ragged batch: exercises the streaming grid + masked last tile.
    batch2, dim2, rank2 = 300, 256, 8
    bound2 = 1.0 / (dim2 ** 0.5)
    w2 = jax.random.uniform(kw, (rank2, dim2), jnp.float32, -bound2, bound2)
    b2 = jax.random.uniform(kb, (rank2,), jnp.float32, -bound2, bound2)
    x2 = jax.random.normal(kx2, (batch2, dim2), jnp.float32)
    y2 = jax.block_until_ready(lowrank_linear(x2, w2, b2))
    assert y2.shape == (batch2, rank2)
    assert jnp.allclose(y2, x2 @ w2.T + b2, atol=1e-4, rtol=1e-4)

    print("KERNEL_OK")
</pallas_src>

<mosaic_0001>
module attributes {stable_mosaic.version = 11 : i64} {
  func.func @_lowrank_kernel(%arg0: i32, %arg1: memref<8x32xf32, #tpu.memory_space<vmem>>, %arg2: memref<32x128xf32, #tpu.memory_space<vmem>>, %arg3: memref<1x128xf32, #tpu.memory_space<vmem>>, %arg4: memref<8x128xf32, #tpu.memory_space<vmem>>) attributes {dimension_semantics = [#tpu.dimension_semantics<parallel>], iteration_bounds = array<i64: 1>, scalar_prefetch = 0 : i64, scratch_operands = 0 : i64, tpu.core_type = #tpu.core_type<tc>, window_params = [{transform_indices = @transform_0, window_bounds = array<i64: 8, 32>}, {pipeline_mode = #tpu.pipeline_mode<synchronous>, transform_indices = @transform_1, window_bounds = array<i64: 32, 128>}, {pipeline_mode = #tpu.pipeline_mode<synchronous>, transform_indices = @transform_2, window_bounds = array<i64: 1, 128>}, {transform_indices = @transform_3, window_bounds = array<i64: 8, 128>}]} {
    %c0 = arith.constant 0 : index
    %c0_0 = arith.constant 0 : index
    %0 = vector.load %arg1[%c0, %c0_0] : memref<8x32xf32, #tpu.memory_space<vmem>>, vector<8x32xf32>
    %c0_1 = arith.constant 0 : index
    %c0_2 = arith.constant 0 : index
    %1 = vector.load %arg2[%c0_1, %c0_2] : memref<32x128xf32, #tpu.memory_space<vmem>>, vector<32x128xf32>
    %cst = arith.constant dense<0.000000e+00> : vector<8x128xf32>
    %2 = tpu.matmul %0, %1, %cst {dimension_numbers = #tpu.dot_dimension_numbers<[1], [0], [0], [1], [0, 0, 1, 1], [], []>} : vector<8x32xf32>, vector<32x128xf32>, vector<8x128xf32> -> vector<8x128xf32>
    %c0_3 = arith.constant 0 : index
    %c0_4 = arith.constant 0 : index
    %3 = vector.load %arg3[%c0_3, %c0_4] : memref<1x128xf32, #tpu.memory_space<vmem>>, vector<1x128xf32>
    %4 = vector.broadcast %3 : vector<1x128xf32> to vector<8x128xf32>
    %5 = arith.addf %2, %4 : vector<8x128xf32>
    %c0_5 = arith.constant 0 : index
    %c0_6 = arith.constant 0 : index
    %6 = vector.load %arg4[%c0_5, %c0_6] : memref<8x128xf32, #tpu.memory_space<vmem>>, vector<8x128xf32>
    tpu.vector_store %arg4[%c0_5, %c0_6], %5 {strides = array<i32>} : memref<8x128xf32, #tpu.memory_space<vmem>>, vector<8x128xf32>,
    return
  }
  func.func @transform_0(%arg0: i32) -> (i32, i32) {
    %c0_i32 = arith.constant 0 : i32
    %c0_i32_0 = arith.constant 0 : i32
    return %arg0, %c0_i32 : i32, i32
  }
  func.func @transform_1(%arg0: i32) -> (i32, i32) {
    %c0_i32 = arith.constant 0 : i32
    %c0_i32_0 = arith.constant 0 : i32
    %c0_i32_1 = arith.constant 0 : i32
    return %c0_i32, %c0_i32_0 : i32, i32
  }
  func.func @transform_2(%arg0: i32) -> (i32, i32) {
    %c0_i32 = arith.constant 0 : i32
    %c0_i32_0 = arith.constant 0 : i32
    %c0_i32_1 = arith.constant 0 : i32
    return %c0_i32, %c0_i32_0 : i32, i32
  }
  func.func @transform_3(%arg0: i32) -> (i32, i32) {
    %c0_i32 = arith.constant 0 : i32
    %c0_i32_0 = arith.constant 0 : i32
    return %arg0, %c0_i32 : i32, i32
  }
}

</mosaic_0001>

<llo_original>
// kernel: tpu_custom_call.1
$region0: #{tpu_custom_call.1}
  #allocation0 [shape = 'u32[]', space=smem, size = 0x4, offset = 0x4, fixed_abs, tag = 'smem constant byte address 0x4 - core index']
  #allocation1 [shape = 'u32[144,128]{1,0:T(1,128)}', space=vmem, size = 0x12000, scoped, tag = 'internal scratch']
  %s0 = inlined_call_operand.hbm [shape: f32[8,32], index: 0, kind: input, shape index: {}]
  %s1 = inlined_call_operand.hbm [shape: f32[32,128], index: 1, kind: input, shape index: {}]
  %s2 = inlined_call_operand.vmem [shape: f32[1,128], index: 2, kind: input, shape index: {}]
  %s3 = inlined_call_operand.hbm [shape: f32[8,128], index: 3, kind: output, shape index: {}]
  %s4 = sld [smem:[#allocation0]]
  $region30: #{tpu_custom_call.1} parent=0
    _
  %s6 = ssub.s32 1, %s4
  %s7 = scalar_select 0, %s6, %s4
  $region1: #{tpu_custom_call.1} parent=0
    #allocation2 [shape = 'u8[4096]{0}', space=vmem, size = 0x1000, scoped, tag = 'input window, operand 0, single buffered']
    #allocation3 [shape = 's32[1]{0}', space=sflag, size = 0x4, scoped, tag = 'scoped memory for tpu_custom_call.1']
    #allocation4 [shape = 's32[1]{0}', space=sflag, size = 0x4, scoped, tag = 'scoped memory for tpu_custom_call.1']
    #allocation5 [shape = 'u8[16384]{0}', space=vmem, size = 0x4000, scoped, tag = 'input window, operand 1, single buffered']
    #allocation6 [shape = 's32[1]{0}', space=sflag, size = 0x4, scoped, tag = 'scoped memory for tpu_custom_call.1']
    #allocation7 [shape = 'u8[4096]{0}', space=vmem, size = 0x1000, scoped, tag = 'output window, operand 0, single buffered']
    %8 = vsyncpa [#allocation3], 0
    %9 = vsyncpa [#allocation6], 0
    %10 = vsyncpa [#allocation4], 0
    // Predicated region
    $region2: #{tpu_custom_call.1} parent=1 // pred_check
      _
    $region3: #{tpu_custom_call.1} parent=1 // pred_check_branch
      %12 = sbr.rel (0) target = $region5
    $region4: #{tpu_custom_call.1} parent=1 // pred_region
      %s14 = ssub.s32 128, 128
      %15 = vsyncadd [#allocation3], %s14
      %s17 = sshll.u32 [#allocation2], 4
      %s18 = int_to_ptr.vmem [resolvable:$true] %s17
      %20 = dma.hbm_to_vmem [thread:$0]  %s0, 128, %s18, [#allocation3]
    $region5: #{tpu_custom_call.1} parent=1 // pred_fallthru
      _
    // Predicated region
    $region6: #{tpu_custom_call.1} parent=1 // pred_check
      _
    $region7: #{tpu_custom_call.1} parent=1 // pred_check_branch
      %22 = sbr.rel (0) target = $region9
    $region8: #{tpu_custom_call.1} parent=1 // pred_region
      %s24 = ssub.s32 512, 512
      %25 = vsyncadd [#allocation6], %s24
      %s26 = sshll.u32 [#allocation5], 4
      %s27 = int_to_ptr.vmem [resolvable:$true] %s26
      %32 = dma.hbm_to_vmem [thread:$0]  %s1, 512, %s27, [#allocation6], 128, 128, 8
    $region9: #{tpu_custom_call.1} parent=1 // pred_fallthru
      _
    // Predicated region
    $region10: #{tpu_custom_call.1} parent=1 // pred_check
      _
    $region11: #{tpu_custom_call.1} parent=1 // pred_check_branch
      %34 = sbr.rel (0) target = $region13
    $region12: #{tpu_custom_call.1} parent=1 // pred_region
      _
    $region13: #{tpu_custom_call.1} parent=1 // pred_fallthru
      _
    // Predicated region
    $region14: #{tpu_custom_call.1} parent=1 // pred_check
      _
    $region15: #{tpu_custom_call.1} parent=1 // pred_check_branch
      %36 = sbr.rel (0) target = $region17
    $region16: #{tpu_custom_call.1} parent=1 // pred_region
      %37 = dma.done [#allocation3], 128
    $region17: #{tpu_custom_call.1} parent=1 // pred_fallthru
      _
    // Predicated region
    $region18: #{tpu_custom_call.1} parent=1 // pred_check
      _
    $region19: #{tpu_custom_call.1} parent=1 // pred_check_branch
      %39 = sbr.rel (0) target = $region21
    $region20: #{tpu_custom_call.1} parent=1 // pred_region
      %40 = dma.done [#allocation6], 512
    $region21: #{tpu_custom_call.1} parent=1 // pred_fallthru
      _
    %v41 = vld [vmem:[#allocation2] sm:$0xff]
    %v42 = vld [vmem:[#allocation5] sm:$0xff]
    %v43 = vld [vmem:[#allocation5 + $0x8] sm:$0xff]
    %v44 = vld [vmem:[#allocation5 + $0x10] sm:$0xff]
    %v45 = vld [vmem:[#allocation5 + $0x18] sm:$0xff]
    %v46 = vld [vmem:[%s2] sm:$0x1]
    %v48 = vlaneseq
    %v49 = vshrl.u32 %v48, 7
    %v50 = vsub.s32 0, %v49
    %v51 = vrot.slane %v46, %v50
    %vm53 = vcmask 261120
    %v55 = vsel %vm53, %v41, 0
    %57 = vmatprep.subr.mxu0 0.0
    %58 = vmatpush1.msra.mxu0 0.0
    %59 = vmatprep.subr.mxu0 0.0
    %60 = vmatpush1.msra.mxu0 0.0
    %61 = vmatprep.subr.mxu0 0.0
    %62 = vmatpush1.msra.mxu0 0.0
    %63 = vmatprep.subr.mxu0 0.0
    %64 = vmatpush1.msra.mxu0 0.0
    %65 = vmatprep.subr.mxu0 0.0
    %66 = vmatpush1.msra.mxu0 0.0
    %67 = vmatprep.subr.mxu0 0.0
    %68 = vmatpush1.msra.mxu0 0.0
    %69 = vmatprep.subr.mxu0 0.0
    %70 = vmatpush1.msra.mxu0 0.0
    %71 = vmatprep.subr.mxu0 0.0
    %72 = vmatpush1.msra.mxu0 0.0
    %73 = vmatprep.subr.mxu0 0.0
    %74 = vmatpush1.msra.mxu0 0.0
    %75 = vmatprep.subr.mxu0 0.0
    %76 = vmatpush1.msra.mxu0 0.0
    %77 = vmatprep.subr.mxu0 0.0
    %78 = vmatpush1.msra.mxu0 0.0
    %79 = vmatprep.subr.mxu0 0.0
    %80 = vmatpush1.msra.mxu0 0.0
    %81 = vmatprep.subr.mxu0 0.0
    %82 = vmatpush1.msra.mxu0 %v45
    %83 = vmatprep.subr.mxu0 0.0
    %84 = vmatpush1.msra.mxu0 %v44
    %85 = vmatprep.subr.mxu0 0.0
    %86 = vmatpush1.msra.mxu0 %v43
    %87 = vmatprep.subr.mxu0 0.0
    %88 = vmatpush1.msra.mxu0 %v42
    %89 = vmatprep.subr.mxu0 0.0
    %90 = vmatpush2.msra.mxu0 0.0
    %91 = vmatprep.subr.mxu0 0.0
    %92 = vmatpush2.msra.mxu0 0.0
    %93 = vmatprep.subr.mxu0 0.0
    %94 = vmatpush2.msra.mxu0 0.0
    %95 = vmatprep.subr.mxu0 0.0
    %96 = vmatpush2.msra.mxu0 0.0
    %97 = vmatprep.subr.mxu0 0.0
    %98 = vmatpush2.msra.mxu0 0.0
    %99 = vmatprep.subr.mxu0 0.0
    %100 = vmatpush2.msra.mxu0 0.0
    %101 = vmatprep.subr.mxu0 0.0
    %102 = vmatpush2.msra.mxu0 0.0
    %103 = vmatprep.subr.mxu0 0.0
    %104 = vmatpush2.msra.mxu0 0.0
    %105 = vmatprep.subr.mxu0 0.0
    %106 = vmatpush2.msra.mxu0 0.0
    %107 = vmatprep.subr.mxu0 0.0
    %108 = vmatpush2.msra.mxu0 0.0
    %109 = vmatprep.subr.mxu0 0.0
    %110 = vmatpush2.msra.mxu0 0.0
    %111 = vmatprep.subr.mxu0 0.0
    %112 = vmatpush2.msra.mxu0 0.0
    %113 = vmatprep.subr.mxu0 0.0
    %114 = vmatpush2.msra.mxu0 0.0
    %115 = vmatprep.subr.mxu0 0.0
    %116 = vmatpush2.msra.mxu0 0.0
    %117 = vmatprep.subr.mxu0 0.0
    %118 = vmatpush2.msra.mxu0 0.0
    %119 = vmatprep.subr.mxu0 0.0
    %120 = vmatpush2.msra.mxu0 0.0
    %121 = vmatprep.mubr.f32.mxu0 0.0
    %122 = vmatmul.mubr.f32.gmra.mxu0 %v55
    %v123 = vpop.f32.mrf.mxu0
    %v124 = vadd.f32 %v51, %v123
    %v125 = vpop.f32.mrf.mxu0
    %126 = vdwg.mxu0
    %127 = vst [vmem:[#allocation7] sm:$0xff] %v124
    // Predicated region
    $region22: #{tpu_custom_call.1} parent=1 // pred_check
      _
    $region23: #{tpu_custom_call.1} parent=1 // pred_check_branch
      %129 = sbr.rel (0) target = $region25
    $region24: #{tpu_custom_call.1} parent=1 // pred_region
      %s131 = ssub.s32 128, 128
      %132 = vsyncadd [#allocation4], %s131
      %s134 = sshll.u32 [#allocation7], 4
      %s135 = int_to_ptr.vmem [resolvable:$true] %s134
      %137 = dma.vmem_to_hbm [thread:$0]  %s135, 128, %s3, [#allocation4]
    $region25: #{tpu_custom_call.1} parent=1 // pred_fallthru
      _
    // Predicated region
    $region26: #{tpu_custom_call.1} parent=1 // pred_check
      _
    $region27: #{tpu_custom_call.1} parent=1 // pred_check_branch
      %139 = sbr.rel (0) target = $region29
    $region28: #{tpu_custom_call.1} parent=1 // pred_region
      %140 = dma.done [#allocation4], 128
    $region29: #{tpu_custom_call.1} parent=1 // pred_fallthru
      _
    %141 = vsyncpa [#allocation3], 1
    %142 = vsyncpa [#allocation6], 1
    %143 = vsyncpa [#allocation4], 1

</llo_original>
